<compile_context>
chip_gen: v7x
topology: tpu7x:2x2x1
jax: 0.10.0
libtpu: 0.0.40
codegen_flags: <defaults>
</compile_context>

<pallas_src>
import jax
import jax.numpy as jnp
from jax.experimental import pallas as pl
from jax.experimental.pallas import tpu as pltpu


MAX_TILE = 256 * 1024  # points per grid step (multiple of 128 lanes)


def _round_up(x, m):
    return (x + m - 1) // m * m


def _sphere_sdf_kernel(params_ref, pts_ref, out_ref):
    # params_ref: (4,)       SMEM   [cx, cy, cz, radius]
    # pts_ref:    (3, TILE)  VMEM   SoA: row0=x, row1=y, row2=z
    # out_ref:    (1, TILE)  VMEM
    x = pts_ref[0:1, :]                       # (1, TILE)
    y = pts_ref[1:2, :]
    z = pts_ref[2:3, :]
    dx = x - params_ref[0]
    dy = y - params_ref[1]
    dz = z - params_ref[2]
    sq = dx * dx + dy * dy + dz * dz          # pure VPU, full lane occupancy
    out_ref[...] = jnp.sqrt(sq) - params_ref[3]


def sphere_sdf_forward(points, center, radius):
    """points: any shape with total elements divisible by 3.
    center: broadcastable to (3,) float32, radius: () float32.
    Returns (N, 1) float32 where N = points.size // 3 (matches torch)."""
    pts = jnp.reshape(points, (-1, 3)).astype(jnp.float32)
    n = pts.shape[0]

    # Tile along the point axis; keep the lane dim a multiple of 128.
    tile = min(MAX_TILE, _round_up(n, 128))
    grid_n = pl.cdiv(n, tile)
    n_pad = grid_n * tile

    # SoA layout (3, n_pad).  The transpose is a one-time layout copy we need
    # anyway; the (small) padding is folded into it rather than being an
    # extra full HBM read+write pass.
    pts_t = jnp.pad(pts, ((0, n_pad - n), (0, 0))).T  # (3, n_pad)

    params = jnp.concatenate(
        [
            jnp.reshape(center, (3,)).astype(jnp.float32),
            jnp.reshape(radius, (1,)).astype(jnp.float32),
        ]
    )  # (4,) -> SMEM

    out = pl.pallas_call(
        _sphere_sdf_kernel,
        out_shape=jax.ShapeDtypeStruct((1, n_pad), jnp.float32),
        grid_spec=pltpu.PrefetchScalarGridSpec(
            num_scalar_prefetch=0,
            grid=(grid_n,),
            in_specs=[
                pl.BlockSpec(memory_space=pltpu.SMEM),          # params (4,)
                pl.BlockSpec((3, tile), lambda i: (0, i)),      # points (3, N)
            ],
            out_specs=pl.BlockSpec((1, tile), lambda i: (0, i)),
        ),
        compiler_params=pltpu.CompilerParams(
            dimension_semantics=("parallel",),
            vmem_limit_bytes=32 * 1024 * 1024,  # ~8 MB working set; safe on v5e/v6e/v7x
        ),
    )(params, pts_t)

    # Drop padded points, return torch-shaped (N, 1).
    return out[0, :n].reshape(n, 1)


class SphereSDF_F:
    """Deterministically initialized, mirrors the torch module's __init__."""

    def __init__(self, center=(0.0, 0.0, 0.0), radius=1.0):
        self.center = jnp.asarray(center, dtype=jnp.float32).reshape(1, 3)
        self.radius = jnp.asarray(radius, dtype=jnp.float32)

    def __call__(self, points):
        return sphere_sdf_forward(points, self.center, self.radius)


if __name__ == "__main__":
    key = jax.random.PRNGKey(0)
    model = SphereSDF_F(center=[0.1, -0.2, 0.3], radius=0.75)

    # Case 1: small (..., 3) point cloud, N a multiple of 128.
    k1, k2 = jax.random.split(key)
    points = jax.random.normal(k1, (2, 64, 3), dtype=jnp.float32) * 2.0
    out = jax.block_until_ready(model(points))
    pts_flat = points.reshape(-1, 3)
    ref = jnp.linalg.norm(pts_flat - model.center, axis=-1, keepdims=True) - model.radius
    assert out.shape == (pts_flat.shape[0], 1)
    assert jnp.allclose(out, ref, atol=1e-5, rtol=1e-5)

    # Case 2: ragged N (not a multiple of 128) to exercise the padded path.
    points2 = jax.random.normal(k2, (5, 37, 3), dtype=jnp.float32)
    out2 = jax.block_until_ready(model(points2))
    pts_flat2 = points2.reshape(-1, 3)
    ref2 = jnp.linalg.norm(pts_flat2 - model.center, axis=-1, keepdims=True) - model.radius
    assert out2.shape == (pts_flat2.shape[0], 1)
    assert jnp.allclose(out2, ref2, atol=1e-5, rtol=1e-5)

    print("KERNEL_OK")
</pallas_src>

<mosaic_0001>
module attributes {stable_mosaic.version = 11 : i64} {
  func.func @_sphere_sdf_kernel(%arg0: i32, %arg1: memref<4xf32, #tpu.memory_space<smem>>, %arg2: memref<3x128xf32, #tpu.memory_space<vmem>>, %arg3: memref<1x128xf32, #tpu.memory_space<vmem>>) attributes {dimension_semantics = [#tpu.dimension_semantics<parallel>], iteration_bounds = array<i64: 1>, scalar_prefetch = 0 : i64, scratch_operands = 0 : i64, tpu.core_type = #tpu.core_type<tc>, window_params = [{transform_indices = @transform_0, window_bounds = array<i64: 4>}, {transform_indices = @transform_1, window_bounds = array<i64: 3, 128>}, {transform_indices = @transform_2, window_bounds = array<i64: 1, 128>}]} {
    %c0 = arith.constant 0 : index
    %c0_0 = arith.constant 0 : index
    %0 = vector.load %arg2[%c0, %c0_0] : memref<3x128xf32, #tpu.memory_space<vmem>>, vector<1x128xf32>
    %c1 = arith.constant 1 : index
    %c0_1 = arith.constant 0 : index
    %1 = vector.load %arg2[%c1, %c0_1] : memref<3x128xf32, #tpu.memory_space<vmem>>, vector<1x128xf32>
    %c2 = arith.constant 2 : index
    %c0_2 = arith.constant 0 : index
    %2 = vector.load %arg2[%c2, %c0_2] : memref<3x128xf32, #tpu.memory_space<vmem>>, vector<1x128xf32>
    %c0_3 = arith.constant 0 : index
    %3 = memref.load %arg1[%c0_3] : memref<4xf32, #tpu.memory_space<smem>>
    %4 = vector.broadcast %3 : f32 to vector<1x128xf32>
    %5 = arith.subf %0, %4 : vector<1x128xf32>
    %c1_4 = arith.constant 1 : index
    %6 = memref.load %arg1[%c1_4] : memref<4xf32, #tpu.memory_space<smem>>
    %7 = vector.broadcast %6 : f32 to vector<1x128xf32>
    %8 = arith.subf %1, %7 : vector<1x128xf32>
    %c2_5 = arith.constant 2 : index
    %9 = memref.load %arg1[%c2_5] : memref<4xf32, #tpu.memory_space<smem>>
    %10 = vector.broadcast %9 : f32 to vector<1x128xf32>
    %11 = arith.subf %2, %10 : vector<1x128xf32>
    %12 = arith.mulf %5, %5 : vector<1x128xf32>
    %13 = arith.mulf %8, %8 : vector<1x128xf32>
    %14 = arith.addf %12, %13 : vector<1x128xf32>
    %15 = arith.mulf %11, %11 : vector<1x128xf32>
    %16 = arith.addf %14, %15 : vector<1x128xf32>
    %17 = math.sqrt %16 : vector<1x128xf32>
    %c3 = arith.constant 3 : index
    %18 = memref.load %arg1[%c3] : memref<4xf32, #tpu.memory_space<smem>>
    %19 = vector.broadcast %18 : f32 to vector<1x128xf32>
    %20 = arith.subf %17, %19 : vector<1x128xf32>
    %c0_6 = arith.constant 0 : index
    %c0_7 = arith.constant 0 : index
    %21 = vector.load %arg3[%c0_6, %c0_7] : memref<1x128xf32, #tpu.memory_space<vmem>>, vector<1x128xf32>
    tpu.vector_store %arg3[%c0_6, %c0_7], %20 {strides = array<i32>} : memref<1x128xf32, #tpu.memory_space<vmem>>, vector<1x128xf32>,
    return
  }
  func.func @transform_0(%arg0: i32) -> i32 {
    %c0_i32 = arith.constant 0 : i32
    %c0_i32_0 = arith.constant 0 : i32
    return %c0_i32 : i32
  }
  func.func @transform_1(%arg0: i32) -> (i32, i32) {
    %c0_i32 = arith.constant 0 : i32
    %c0_i32_0 = arith.constant 0 : i32
    return %c0_i32, %arg0 : i32, i32
  }
  func.func @transform_2(%arg0: i32) -> (i32, i32) {
    %c0_i32 = arith.constant 0 : i32
    %c0_i32_0 = arith.constant 0 : i32
    return %c0_i32, %arg0 : i32, i32
  }
}

</mosaic_0001>

<llo_original>
// kernel: tpu_custom_call.1
$region0: #{tpu_custom_call.1}
  #allocation0 [shape = 'u32[]', space=smem, size = 0x4, offset = 0x4, fixed_abs, tag = 'smem constant byte address 0x4 - core index']
  #allocation1 [shape = 'u32[144,128]{1,0:T(1,128)}', space=vmem, size = 0x12000, scoped, tag = 'internal scratch']
  %s0 = inlined_call_operand.hbm [shape: f32[4], index: 0, kind: input, shape index: {}]
  %s1 = inlined_call_operand.hbm [shape: f32[3,128], index: 1, kind: input, shape index: {}]
  %s2 = inlined_call_operand.hbm [shape: f32[1,128], index: 2, kind: output, shape index: {}]
  %s3 = sld [smem:[#allocation0]]
  $region26: #{tpu_custom_call.1} parent=0
    _
  %s5 = ssub.s32 1, %s3
  %s6 = scalar_select 0, %s5, %s3
  $region1: #{tpu_custom_call.1} parent=0
    #allocation2 [shape = 'u8[512]{0}', space=smem, size = 0x200, scoped, tag = 'input window, operand 0, single buffered']
    #allocation3 [shape = 's32[1]{0}', space=sflag, size = 0x4, scoped, tag = 'scoped memory for tpu_custom_call.1']
    #allocation4 [shape = 's32[1]{0}', space=sflag, size = 0x4, scoped, tag = 'scoped memory for tpu_custom_call.1']
    #allocation5 [shape = 's32[1]{0}', space=sflag, size = 0x4, scoped, tag = 'scoped memory for tpu_custom_call.1']
    #allocation6 [shape = 'u8[2048]{0}', space=vmem, size = 0x800, scoped, tag = 'input window, operand 1, single buffered']
    #allocation7 [shape = 'u8[512]{0}', space=vmem, size = 0x400, scoped, tag = 'output window, operand 0, single buffered']
    %7 = vsyncpa [#allocation5], 0
    %8 = vsyncpa [#allocation3], 0
    %9 = vsyncpa [#allocation4], 0
    // Predicated region
    $region2: #{tpu_custom_call.1} parent=1 // pred_check
      _
    $region3: #{tpu_custom_call.1} parent=1 // pred_check_branch
      %11 = sbr.rel (0) target = $region5
    $region4: #{tpu_custom_call.1} parent=1 // pred_region
      %s13 = ssub.s32 16, 16
      %14 = vsyncadd [#allocation5], %s13
      %17 = dma.hbm_to_smem %s0, 16, [#allocation2], [#allocation5]
    $region5: #{tpu_custom_call.1} parent=1 // pred_fallthru
      _
    // Predicated region
    $region6: #{tpu_custom_call.1} parent=1 // pred_check
      _
    $region7: #{tpu_custom_call.1} parent=1 // pred_check_branch
      %19 = sbr.rel (0) target = $region9
    $region8: #{tpu_custom_call.1} parent=1 // pred_region
      %s21 = ssub.s32 64, 64
      %22 = vsyncadd [#allocation3], %s21
      %s24 = sshll.u32 [#allocation6], 4
      %s25 = int_to_ptr.vmem [resolvable:$true] %s24
      %27 = dma.hbm_to_vmem [thread:$0]  %s1, 64, %s25, [#allocation3]
    $region9: #{tpu_custom_call.1} parent=1 // pred_fallthru
      _
    // Predicated region
    $region10: #{tpu_custom_call.1} parent=1 // pred_check
      _
    $region11: #{tpu_custom_call.1} parent=1 // pred_check_branch
      %29 = sbr.rel (0) target = $region13
    $region12: #{tpu_custom_call.1} parent=1 // pred_region
      %30 = dma.done [#allocation5], 16
    $region13: #{tpu_custom_call.1} parent=1 // pred_fallthru
      _
    // Predicated region
    $region14: #{tpu_custom_call.1} parent=1 // pred_check
      _
    $region15: #{tpu_custom_call.1} parent=1 // pred_check_branch
      %32 = sbr.rel (0) target = $region17
    $region16: #{tpu_custom_call.1} parent=1 // pred_region
      %33 = dma.done [#allocation3], 64
    $region17: #{tpu_custom_call.1} parent=1 // pred_fallthru
      _
    %34 = sfence
    %v35 = vld [vmem:[#allocation6] sm:$0x1]
    %v36 = vld [vmem:[#allocation6 + $0x1] sm:$0x1]
    %v37 = vld [vmem:[#allocation6 + $0x2] sm:$0x1]
    %s38 = sld [smem:[#allocation2]]
    %v39 = vstv %s38
    %v40 = vsub.f32 %v35, %v39
    %s41 = sld [smem:[#allocation2 + $0x1]]
    %v42 = vstv %s41
    %v43 = vsub.f32 %v36, %v42
    %s44 = sld [smem:[#allocation2 + $0x2]]
    %v45 = vstv %s44
    %v46 = vsub.f32 %v37, %v45
    %v47 = vmul.f32 %v40, %v40
    %v48 = vmul.f32 %v43, %v43
    %v49 = vadd.f32 %v47, %v48
    %v50 = vmul.f32 %v46, %v46
    %v51 = vadd.f32 %v49, %v50
    %v52 = vrsqrt.pop %v51
    %v53 = vmul.f32 %v51, %v52
    %vm54 = vcmp.eq.f32.partialorder %v51, inf
    %v55 = vsel %vm54, %v51, %v53
    %vm56 = vcmp.eq.f32.partialorder %v51, 0.0
    %v57 = vand.u32 %v51, 2147483648
    %v58 = vsel %vm56, %v57, %v55
    %s59 = sld [smem:[#allocation2 + $0x3]]
    %v60 = vstv %s59
    %v61 = vsub.f32 %v58, %v60
    %62 = vst [vmem:[#allocation7] sm:$0x1] %v61
    // Predicated region
    $region18: #{tpu_custom_call.1} parent=1 // pred_check
      _
    $region19: #{tpu_custom_call.1} parent=1 // pred_check_branch
      %64 = sbr.rel (0) target = $region21
    $region20: #{tpu_custom_call.1} parent=1 // pred_region
      %s66 = ssub.s32 16, 16
      %67 = vsyncadd [#allocation4], %s66
      %s69 = sshll.u32 [#allocation7], 4
      %s70 = int_to_ptr.vmem [resolvable:$true] %s69
      %72 = dma.vmem_to_hbm [thread:$0]  %s70, 16, %s2, [#allocation4]
    $region21: #{tpu_custom_call.1} parent=1 // pred_fallthru
      _
    // Predicated region
    $region22: #{tpu_custom_call.1} parent=1 // pred_check
      _
    $region23: #{tpu_custom_call.1} parent=1 // pred_check_branch
      %74 = sbr.rel (0) target = $region25
    $region24: #{tpu_custom_call.1} parent=1 // pred_region
      %75 = dma.done [#allocation4], 16
    $region25: #{tpu_custom_call.1} parent=1 // pred_fallthru
      _
    %76 = vsyncpa [#allocation3], 1
    %77 = vsyncpa [#allocation4], 1
    %78 = vsyncpa [#allocation5], 1

</llo_original>
